<compile_context>
chip_gen: v7x
topology: tpu7x:2x2x1
jax: 0.10.0
libtpu: 0.0.40
codegen_flags: <defaults>
</compile_context>

<pallas_src>
import functools

import jax
import jax.numpy as jnp
from jax.experimental import pallas as pl
from jax.experimental.pallas import tpu as pltpu


def _pow_const_exponent(x, q):
    """Specialize x ** q for common Python-float exponents (trace time)."""
    if q == 2.0:
        return x * x
    if q == 1.5:
        return x * jnp.sqrt(x)
    if q == 1.0:
        return x
    if q == 0.5:
        return jnp.sqrt(x)
    return jnp.power(x, q)


def _nce_aue_kernel(pred_ref, labels_ref, out_ref, acc_ref, *,
                    n_total, num_classes, tile_n, steps_per_core,
                    first_masked, any_masked, alpha, beta, a, q):
    i = pl.program_id(0)          # core-split axis ("parallel")
    j = pl.program_id(1)          # batch-tile axis ("arbitrary", reduction)

    @pl.when(j == 0)
    def _init():
        acc_ref[...] = jnp.zeros_like(acc_ref)

    x = pred_ref[...].astype(jnp.float32)            # (C, T)  batch on lanes
    lbl = labels_ref[...]                            # (1, T)  int32

    # ---- per-sample class reductions (all along sublanes, per lane) ----
    m = jnp.max(x, axis=0, keepdims=True)            # (1, T)
    sum_x = jnp.sum(x, axis=0, keepdims=True)        # (1, T)
    rows = jax.lax.broadcasted_iota(jnp.int32, (num_classes, tile_n), 0)
    x_t = jnp.sum(jnp.where(rows == lbl, x, 0.0), axis=0, keepdims=True)

    # softmax denominator: exp(x - m) is fused into the reduce, no stored
    # (C, T) temporary.
    se = jnp.sum(jnp.exp(x - m), axis=0, keepdims=True)   # (1, T)
    log_se = jnp.log(se)                                   # (1, T)

    # ---- NCELoss (scale = alpha) ----
    logpt_t = x_t - m - log_se                             # (1, T)
    sum_logpt = sum_x - num_classes * (m + log_se)         # (1, T)  (< 0)
    nce = logpt_t / sum_logpt                              # (1, T)

    # ---- AUELoss (scale = beta) ----
    p_t = jnp.exp(logpt_t)                                 # softmax at label
    base = a - p_t                                         # a=6 -> positive
    aue = (_pow_const_exponent(base, q) - (a - 1.0) ** q) * (1.0 / q)

    contrib = ((nce if alpha == 1.0 else alpha * nce)
               + (aue if beta == 1.0 else beta * aue))     # (1, T)

    if not any_masked:
        # All tiles are full and in-bounds: no mask ops on the hot path.
        acc_ref[...] += contrib
    else:
        logical = i * steps_per_core + j                   # global block idx

        @pl.when(logical < first_masked)
        def _full_tile():
            acc_ref[...] += contrib

        @pl.when(logical >= first_masked)
        def _ragged_or_overhang_tile():
            lane = jax.lax.broadcasted_iota(jnp.int32, (1, tile_n), 1)
            valid = (logical * tile_n + lane) < n_total
            # SELECT (not multiply) so NaN/Inf in dead lanes can't propagate.
            acc_ref[...] += jnp.where(valid, contrib, 0.0)

    @pl.when(j == pl.num_programs(1) - 1)
    def _flush():
        total = jnp.sum(acc_ref[...])                      # per-core partial
        r = jax.lax.broadcasted_iota(jnp.int32, (8, 128), 0)
        c = jax.lax.broadcasted_iota(jnp.int32, (8, 128), 1)
        out_ref[...] = jnp.where((r == 0) & (c == 0), total, 0.0)


def nce_and_aue(pred, labels, *, num_classes=10, alpha=1.0, beta=1.0,
                a=6.0, q=1.5, tile_n=None, max_tile_n=16384, num_cores=2,
                input_dtype=None, pred_is_class_major=False):
    """NCE + AUE loss.

    pred: (N, num_classes) float logits, or (num_classes, N) if
          pred_is_class_major=True (avoids the wrapper transpose entirely).
    labels: (N,) int class indices.
    """
    if pred_is_class_major:
        c, n = pred.shape
        pred_t = pred
    else:
        n, c = pred.shape
        # One extra HBM read+write; pass class-major logits to avoid it.
        pred_t = jnp.transpose(pred)
    assert c == num_classes

    if input_dtype is not None:
        pred_t = pred_t.astype(input_dtype)   # e.g. bf16 HBM read on v6e/v7x

    if tile_n is None:
        # Whole batch as one block when it fits; else big 128-aligned tiles.
        tile_n = n if n <= max_tile_n else max_tile_n

    total_steps = pl.cdiv(n, tile_n)
    cores = 1 if total_steps <= 1 else min(num_cores, total_steps)
    spc = pl.cdiv(total_steps, cores)               # steps per core
    ragged = (n % tile_n) != 0
    overhang = cores * spc > total_steps            # redundant, fully-masked steps
    first_masked = total_steps - 1 if ragged else total_steps
    any_masked = ragged or overhang
    last_block = total_steps - 1

    if overhang:
        # Clamp so the DMA never targets a fully out-of-bounds block; the
        # in-kernel validity mask zeroes the redundant step's contribution.
        idx_map = lambda i, j: (0, jnp.minimum(i * spc + j, last_block))
    else:
        idx_map = lambda i, j: (0, i * spc + j)

    labels2d = labels.astype(jnp.int32).reshape(1, n)

    kernel = functools.partial(
        _nce_aue_kernel, n_total=n, num_classes=c, tile_n=tile_n,
        steps_per_core=spc, first_masked=first_masked, any_masked=any_masked,
        alpha=float(alpha), beta=float(beta), a=float(a), q=float(q))

    out = pl.pallas_call(
        kernel,
        out_shape=jax.ShapeDtypeStruct((cores * 8, 128), jnp.float32),
        grid_spec=pltpu.PrefetchScalarGridSpec(
            num_scalar_prefetch=0,
            grid=(cores, spc),
            in_specs=[
                pl.BlockSpec((c, tile_n), idx_map),
                pl.BlockSpec((1, tile_n), idx_map),
            ],
            out_specs=pl.BlockSpec((8, 128), lambda i, j: (i, 0)),
            scratch_shapes=[pltpu.VMEM((1, tile_n), jnp.float32)],
        ),
        compiler_params=pltpu.CompilerParams(
            dimension_semantics=("parallel", "arbitrary")),
    )(pred_t, labels2d)

    # Only [i*8, 0] of each per-core block is non-zero; summing all is exact.
    return jnp.sum(out) * (1.0 / n)


def _reference(pred, labels, *, num_classes=10, alpha=1.0, beta=1.0,
               a=6.0, q=1.5):
    pred = pred.astype(jnp.float32)
    logpt = jax.nn.log_softmax(pred, axis=1)
    p = jax.nn.softmax(pred, axis=1)
    onehot = jax.nn.one_hot(labels, num_classes, dtype=jnp.float32)
    nce = -jnp.sum(onehot * logpt, axis=1) / (-jnp.sum(logpt, axis=1))
    nce_loss = alpha * jnp.mean(nce)
    s = jnp.sum(onehot * p, axis=1)
    aue = (jnp.power(a - s, q) - (a - 1.0) ** q) / q
    aue_loss = beta * jnp.mean(aue)
    return nce_loss + aue_loss


if __name__ == "__main__":
    key = jax.random.PRNGKey(0)
    k1, k2 = jax.random.split(key)
    N, C = 500, 10                 # N not a multiple of 128 -> exercises masking
    pred = jax.random.normal(k1, (N, C), dtype=jnp.float32)
    labels = jax.random.randint(k2, (N,), 0, C, dtype=jnp.int32)

    ref = _reference(pred, labels, num_classes=C)

    # 1) default path: whole batch as a single block, single core.
    out1 = jax.block_until_ready(nce_and_aue(pred, labels, num_classes=C))
    assert jnp.allclose(out1, ref, rtol=1e-5, atol=1e-5), (out1, ref)

    # 2) multi-tile + 2-core split + ragged last tile.
    out2 = jax.block_until_ready(
        nce_and_aue(pred, labels, num_classes=C, tile_n=128))
    assert jnp.allclose(out2, ref, rtol=1e-5, atol=1e-5), (out2, ref)

    # 3) odd tile count -> clamped, fully-masked overhang step on core 1.
    pred3, labels3 = pred[:300], labels[:300]
    ref3 = _reference(pred3, labels3, num_classes=C)
    out3 = jax.block_until_ready(
        nce_and_aue(pred3, labels3, num_classes=C, tile_n=128))
    assert jnp.allclose(out3, ref3, rtol=1e-5, atol=1e-5), (out3, ref3)

    # 4) class-major (C, N) logits supplied directly -> no wrapper transpose.
    out4 = jax.block_until_ready(
        nce_and_aue(pred.T, labels, num_classes=C, pred_is_class_major=True))
    assert jnp.allclose(out4, ref, rtol=1e-5, atol=1e-5), (out4, ref)

    print("KERNEL_OK")
</pallas_src>

<mosaic_0001>
module attributes {stable_mosaic.version = 11 : i64} {
  func.func @_nce_aue_kernel(%arg0: i32, %arg1: i32, %arg2: memref<10x500xf32, #tpu.memory_space<vmem>>, %arg3: memref<1x500xi32, #tpu.memory_space<vmem>>, %arg4: memref<8x128xf32, #tpu.memory_space<vmem>>, %arg5: memref<1x500xf32, #tpu.memory_space<vmem>>) attributes {dimension_semantics = [#tpu.dimension_semantics<parallel>, #tpu.dimension_semantics<arbitrary>], iteration_bounds = array<i64: 1, 1>, scalar_prefetch = 0 : i64, scratch_operands = 1 : i64, tpu.core_type = #tpu.core_type<tc>, window_params = [{transform_indices = @transform_0, window_bounds = array<i64: 10, 500>}, {transform_indices = @transform_1, window_bounds = array<i64: 1, 500>}, {transform_indices = @transform_2, window_bounds = array<i64: 8, 128>}]} {
    %c0_i32 = arith.constant 0 : i32
    %0 = arith.cmpi eq, %arg1, %c0_i32 : i32
    %1 = arith.extui %0 : i1 to i32
    %c0_i32_0 = arith.constant 0 : i32
    %2 = arith.cmpi ne, %1, %c0_i32_0 : i32
    scf.if %2 {
      %cst_18 = arith.constant 0.000000e+00 : f32
      %45 = vector.broadcast %cst_18 : f32 to vector<1x500xf32>
      %c0_19 = arith.constant 0 : index
      %c0_20 = arith.constant 0 : index
      %46 = vector.load %arg5[%c0_19, %c0_20] : memref<1x500xf32, #tpu.memory_space<vmem>>, vector<1x500xf32>
      tpu.vector_store %arg5[%c0_19, %c0_20], %45 {strides = array<i32>} : memref<1x500xf32, #tpu.memory_space<vmem>>, vector<1x500xf32>,
    } else {
    }
    %c0 = arith.constant 0 : index
    %c0_1 = arith.constant 0 : index
    %3 = vector.load %arg2[%c0, %c0_1] : memref<10x500xf32, #tpu.memory_space<vmem>>, vector<10x500xf32>
    %c0_2 = arith.constant 0 : index
    %c0_3 = arith.constant 0 : index
    %4 = vector.load %arg3[%c0_2, %c0_3] : memref<1x500xi32, #tpu.memory_space<vmem>>, vector<1x500xi32>
    %cst = arith.constant dense<0xFF800000> : vector<500xf32>
    %5 = vector.multi_reduction <maximumf>, %3, %cst [0] : vector<10x500xf32> to vector<500xf32>
    %6 = vector.shape_cast %5 : vector<500xf32> to vector<1x500xf32>
    %cst_4 = arith.constant dense<0.000000e+00> : vector<500xf32>
    %7 = vector.multi_reduction <add>, %3, %cst_4 [0] : vector<10x500xf32> to vector<500xf32>
    %8 = vector.shape_cast %7 : vector<500xf32> to vector<1x500xf32>
    %9 = tpu.iota {dimensions = array<i32: 0>} : vector<10x500xi32>
    %10 = vector.broadcast %4 : vector<1x500xi32> to vector<10x500xi32>
    %11 = arith.cmpi eq, %9, %10 : vector<10x500xi32>
    %cst_5 = arith.constant 0.000000e+00 : f32
    %12 = vector.broadcast %cst_5 : f32 to vector<10x500xf32>
    %13 = arith.select %11, %3, %12 : vector<10x500xi1>, vector<10x500xf32>
    %cst_6 = arith.constant dense<0.000000e+00> : vector<500xf32>
    %14 = vector.multi_reduction <add>, %13, %cst_6 [0] : vector<10x500xf32> to vector<500xf32>
    %15 = vector.shape_cast %14 : vector<500xf32> to vector<1x500xf32>
    %16 = vector.broadcast %6 : vector<1x500xf32> to vector<10x500xf32>
    %17 = arith.subf %3, %16 : vector<10x500xf32>
    %18 = math.exp %17 : vector<10x500xf32>
    %cst_7 = arith.constant dense<0.000000e+00> : vector<500xf32>
    %19 = vector.multi_reduction <add>, %18, %cst_7 [0] : vector<10x500xf32> to vector<500xf32>
    %20 = vector.shape_cast %19 : vector<500xf32> to vector<1x500xf32>
    %21 = math.log %20 : vector<1x500xf32>
    %22 = arith.subf %15, %6 : vector<1x500xf32>
    %23 = arith.subf %22, %21 : vector<1x500xf32>
    %24 = arith.addf %6, %21 : vector<1x500xf32>
    %cst_8 = arith.constant 1.000000e+01 : f32
    %25 = vector.broadcast %cst_8 : f32 to vector<1x500xf32>
    %26 = arith.mulf %25, %24 : vector<1x500xf32>
    %27 = arith.subf %8, %26 : vector<1x500xf32>
    %28 = arith.divf %23, %27 : vector<1x500xf32>
    %29 = math.exp %23 : vector<1x500xf32>
    %cst_9 = arith.constant 6.000000e+00 : f32
    %30 = vector.broadcast %cst_9 : f32 to vector<1x500xf32>
    %31 = arith.subf %30, %29 : vector<1x500xf32>
    %32 = math.sqrt %31 : vector<1x500xf32>
    %33 = arith.mulf %31, %32 : vector<1x500xf32>
    %cst_10 = arith.constant 11.1803398 : f32
    %34 = vector.broadcast %cst_10 : f32 to vector<1x500xf32>
    %35 = arith.subf %33, %34 : vector<1x500xf32>
    %cst_11 = arith.constant 0.666666686 : f32
    %36 = vector.broadcast %cst_11 : f32 to vector<1x500xf32>
    %37 = arith.mulf %35, %36 : vector<1x500xf32>
    %38 = arith.addf %28, %37 : vector<1x500xf32>
    %c0_12 = arith.constant 0 : index
    %c0_13 = arith.constant 0 : index
    %39 = vector.load %arg5[%c0_12, %c0_13] : memref<1x500xf32, #tpu.memory_space<vmem>>, vector<1x500xf32>
    %40 = arith.addf %39, %38 : vector<1x500xf32>
    %c0_14 = arith.constant 0 : index
    %c0_15 = arith.constant 0 : index
    %41 = vector.load %arg5[%c0_14, %c0_15] : memref<1x500xf32, #tpu.memory_space<vmem>>, vector<1x500xf32>
    tpu.vector_store %arg5[%c0_14, %c0_15], %40 {strides = array<i32>} : memref<1x500xf32, #tpu.memory_space<vmem>>, vector<1x500xf32>,
    %c0_i32_16 = arith.constant 0 : i32
    %42 = arith.cmpi eq, %arg1, %c0_i32_16 : i32
    %43 = arith.extui %42 : i1 to i32
    %c0_i32_17 = arith.constant 0 : i32
    %44 = arith.cmpi ne, %43, %c0_i32_17 : i32
    scf.if %44 {
      %c0_18 = arith.constant 0 : index
      %c0_19 = arith.constant 0 : index
      %45 = vector.load %arg5[%c0_18, %c0_19] : memref<1x500xf32, #tpu.memory_space<vmem>>, vector<1x500xf32>
      %46 = vector.shape_cast %45 : vector<1x500xf32> to vector<1x1x500xf32>
      %cst_20 = arith.constant dense<0.000000e+00> : vector<1xf32>
      %47 = vector.multi_reduction <add>, %46, %cst_20 [1, 2] : vector<1x1x500xf32> to vector<1xf32>
      %48 = vector.shape_cast %47 : vector<1xf32> to vector<1x1x1xf32>
      %49 = vector.extract %48[0, 0, 0] : f32 from vector<1x1x1xf32>
      %50 = tpu.iota {dimensions = array<i32: 0>} : vector<8x128xi32>
      %51 = tpu.iota {dimensions = array<i32: 1>} : vector<8x128xi32>
      %c0_i32_21 = arith.constant 0 : i32
      %52 = vector.broadcast %c0_i32_21 : i32 to vector<8x128xi32>
      %53 = arith.cmpi eq, %50, %52 : vector<8x128xi32>
      %c0_i32_22 = arith.constant 0 : i32
      %54 = vector.broadcast %c0_i32_22 : i32 to vector<8x128xi32>
      %55 = arith.cmpi eq, %51, %54 : vector<8x128xi32>
      %56 = arith.andi %53, %55 : vector<8x128xi1>
      %cst_23 = arith.constant 0.000000e+00 : f32
      %57 = vector.broadcast %49 : f32 to vector<8x128xf32>
      %58 = vector.broadcast %cst_23 : f32 to vector<8x128xf32>
      %59 = arith.select %56, %57, %58 : vector<8x128xi1>, vector<8x128xf32>
      %c0_24 = arith.constant 0 : index
      %c0_25 = arith.constant 0 : index
      %60 = vector.load %arg4[%c0_24, %c0_25] : memref<8x128xf32, #tpu.memory_space<vmem>>, vector<8x128xf32>
      tpu.vector_store %arg4[%c0_24, %c0_25], %59 {strides = array<i32>} : memref<8x128xf32, #tpu.memory_space<vmem>>, vector<8x128xf32>,
    } else {
    }
    return
  }
  func.func @transform_0(%arg0: i32, %arg1: i32) -> (i32, i32) {
    %c1_i32 = arith.constant 1 : i32
    %0 = arith.muli %arg0, %c1_i32 : i32
    %1 = arith.addi %0, %arg1 : i32
    %c0_i32 = arith.constant 0 : i32
    %c0_i32_0 = arith.constant 0 : i32
    return %c0_i32, %1 : i32, i32
  }
  func.func @transform_1(%arg0: i32, %arg1: i32) -> (i32, i32) {
    %c1_i32 = arith.constant 1 : i32
    %0 = arith.muli %arg0, %c1_i32 : i32
    %1 = arith.addi %0, %arg1 : i32
    %c0_i32 = arith.constant 0 : i32
    %c0_i32_0 = arith.constant 0 : i32
    return %c0_i32, %1 : i32, i32
  }
  func.func @transform_2(%arg0: i32, %arg1: i32) -> (i32, i32) {
    %c0_i32 = arith.constant 0 : i32
    %c0_i32_0 = arith.constant 0 : i32
    return %arg0, %c0_i32 : i32, i32
  }
}

</mosaic_0001>

<llo_original>
// kernel: tpu_custom_call.1
$region0: #{tpu_custom_call.1}
  #allocation0 [shape = 'u32[]', space=smem, size = 0x4, offset = 0x4, fixed_abs, tag = 'smem constant byte address 0x4 - core index']
  #allocation1 [shape = 'u32[144,128]{1,0:T(1,128)}', space=vmem, size = 0x12000, scoped, tag = 'internal scratch']
  #allocation2 [shape = 'f32[1,500]{1,0:T(1,128)}', space=vmem, size = 0x800, scoped, tag = 'scratch operand']
  %s0 = inlined_call_operand.hbm [shape: f32[10,500], index: 0, kind: input, shape index: {}]
  %s1 = inlined_call_operand.hbm [shape: s32[1,500], index: 1, kind: input, shape index: {}]
  %s2 = inlined_call_operand.hbm [shape: f32[8,128], index: 2, kind: output, shape index: {}]
  %s3 = sld [smem:[#allocation0]]
  $region34: #{tpu_custom_call.1} parent=0
    _
  %s5 = ssub.s32 1, %s3
  %s6 = scalar_select 0, %s5, %s3
  $region1: #{tpu_custom_call.1} parent=0
    #allocation3 [shape = 'u8[32768]{0}', space=vmem, size = 0x8000, scoped, tag = 'input window, operand 0, single buffered']
    #allocation4 [shape = 's32[1]{0}', space=sflag, size = 0x4, scoped, tag = 'scoped memory for tpu_custom_call.1']
    #allocation5 [shape = 's32[1]{0}', space=sflag, size = 0x4, scoped, tag = 'scoped memory for tpu_custom_call.1']
    #allocation6 [shape = 'u8[2048]{0}', space=vmem, size = 0x800, scoped, tag = 'input window, operand 1, single buffered']
    #allocation7 [shape = 's32[1]{0}', space=sflag, size = 0x4, scoped, tag = 'scoped memory for tpu_custom_call.1']
    #allocation8 [shape = 'u8[4096]{0}', space=vmem, size = 0x1000, scoped, tag = 'output window, operand 0, single buffered']
    %7 = vsyncpa [#allocation4], 0
    %8 = vsyncpa [#allocation7], 0
    %9 = vsyncpa [#allocation5], 0
    // Predicated region
    $region2: #{tpu_custom_call.1} parent=1 // pred_check
      _
    $region3: #{tpu_custom_call.1} parent=1 // pred_check_branch
      %11 = sbr.rel (0) target = $region5
    $region4: #{tpu_custom_call.1} parent=1 // pred_region
      %s12 = sadd.s32 0, 0
      %s13 = smul.u32 4, %s12
      %s15 = ssub.s32 1024, 1024
      %16 = vsyncadd [#allocation4], %s15
      %s17 = smul.addr %s13, 128
      %s18 = scalar_lea.hbm %s0, %s17
      %s19 = sshll.u32 [#allocation3], 4
      %s20 = int_to_ptr.vmem [resolvable:$true] %s19
      %25 = dma.hbm_to_vmem [thread:$0]  %s18, 1024, %s20, [#allocation4], 512, 512, 32
    $region5: #{tpu_custom_call.1} parent=1 // pred_fallthru
      _
    // Predicated region
    $region6: #{tpu_custom_call.1} parent=1 // pred_check
      _
    $region7: #{tpu_custom_call.1} parent=1 // pred_check_branch
      %27 = sbr.rel (0) target = $region9
    $region8: #{tpu_custom_call.1} parent=1 // pred_region
      %s28 = sadd.s32 0, 0
      %s29 = smul.u32 4, %s28
      %s31 = ssub.s32 64, 64
      %32 = vsyncadd [#allocation7], %s31
      %s33 = smul.addr %s29, 16
      %s34 = scalar_lea.hbm %s1, %s33
      %s36 = sshll.u32 [#allocation6], 4
      %s37 = int_to_ptr.vmem [resolvable:$true] %s36
      %39 = dma.hbm_to_vmem [thread:$0]  %s34, 64, %s37, [#allocation7]
    $region9: #{tpu_custom_call.1} parent=1 // pred_fallthru
      _
    // Predicated region
    $region10: #{tpu_custom_call.1} parent=1 // pred_check
      _
    $region11: #{tpu_custom_call.1} parent=1 // pred_check_branch
      %41 = sbr.rel (0) target = $region13
    $region12: #{tpu_custom_call.1} parent=1 // pred_region
      %42 = dma.done [#allocation4], 1024
    $region13: #{tpu_custom_call.1} parent=1 // pred_fallthru
      _
    // Predicated region
    $region14: #{tpu_custom_call.1} parent=1 // pred_check
      _
    $region15: #{tpu_custom_call.1} parent=1 // pred_check_branch
      %44 = sbr.rel (0) target = $region17
    $region16: #{tpu_custom_call.1} parent=1 // pred_region
      %45 = dma.done [#allocation7], 64
    $region17: #{tpu_custom_call.1} parent=1 // pred_fallthru
      _
    %s46 = sadd.s32 0, 0
    %s47 = smul.u32 4, %s46
    %s48 = sadd.s32 0, 0
    %s49 = smul.u32 4, %s48
    %p50 = scmp.eq.s32.totalorder 0, 0
    // Predicated region
    $region18: #{tpu_custom_call.1} parent=1 // pred_check
      %p51 = pneg %p50
    $region19: #{tpu_custom_call.1} parent=1 // pred_check_branch
      %53 = sbr.rel (%p51) target = $region21
    $region20: #{tpu_custom_call.1} parent=1 // pred_region
      %v54 = vlaneseq
      %vm55 = vcmp.ge.s32.totalorder %v54, 0
      %vm56 = vcmp.lt.s32.totalorder %v54, 500
      %vm57 = vmand %vm55, %vm56
      %58 = vst.msk [vmem:[#allocation2] sm:$0xf] %vm57, 0.0
    $region21: #{tpu_custom_call.1} parent=1 // pred_fallthru
      _
    %v59 = vld [vmem:[#allocation3] sm:$0xff]
    %v60 = vld [vmem:[#allocation3 + $0x8] sm:$0xff]
    %v61 = vld [vmem:[#allocation3 + $0x10] sm:$0xff]
    %v62 = vld [vmem:[#allocation3 + $0x18] sm:$0xff]
    %v63 = vld [vmem:[#allocation3 + $0x20] sm:$0x3]
    %v64 = vld [vmem:[#allocation3 + $0x28] sm:$0x3]
    %v65 = vld [vmem:[#allocation3 + $0x30] sm:$0x3]
    %v66 = vld [vmem:[#allocation3 + $0x38] sm:$0x3]
    %v67 = vld [vmem:[#allocation6] sm:$0xf]
    %vm68 = vcmask 1041408
    %v69 = vsel %vm68, %v63, -inf
    %v70 = vmax.f32 %v59, %v69
    %v71 = vrot.slane %v70, 4
    %v72 = vmax.f32 %v70, %v71
    %v73 = vrot.slane %v72, 2
    %v74 = vmax.f32 %v72, %v73
    %v75 = vrot.slane %v74, 1
    %v76 = vmax.f32 %v74, %v75
    %v77 = vsel %vm68, %v64, -inf
    %v78 = vmax.f32 %v60, %v77
    %v79 = vrot.slane %v78, 4
    %v80 = vmax.f32 %v78, %v79
    %v81 = vrot.slane %v80, 2
    %v82 = vmax.f32 %v80, %v81
    %v83 = vrot.slane %v82, 1
    %v84 = vmax.f32 %v82, %v83
    %v85 = vsel %vm68, %v65, -inf
    %v86 = vmax.f32 %v61, %v85
    %v87 = vrot.slane %v86, 4
    %v88 = vmax.f32 %v86, %v87
    %v89 = vrot.slane %v88, 2
    %v90 = vmax.f32 %v88, %v89
    %v91 = vrot.slane %v90, 1
    %v92 = vmax.f32 %v90, %v91
    %vm93 = vcmask 949248
    %v94 = vsel %vm93, %v62, -inf
    %vm95 = vcmask 943104
    %v96 = vsel %vm95, %v66, -inf
    %v97 = vmax.f32 %v94, %v96
    %v98 = vrot.slane %v97, 4
    %v99 = vmax.f32 %v97, %v98
    %v100 = vrot.slane %v99, 2
    %v101 = vmax.f32 %v99, %v100
    %v102 = vrot.slane %v101, 1
    %v103 = vmax.f32 %v101, %v102
    %v104 = vsel %vm68, %v63, 0.0
    %v105 = vadd.f32 %v59, %v104
    %v106 = vrot.slane %v105, 4
    %v107 = vadd.f32 %v105, %v106
    %v108 = vrot.slane %v107, 2
    %v109 = vadd.f32 %v107, %v108
    %v110 = vrot.slane %v109, 1
    %v111 = vadd.f32 %v109, %v110
    %v112 = vsel %vm68, %v64, 0.0
    %v113 = vadd.f32 %v60, %v112
    %v114 = vrot.slane %v113, 4
    %v115 = vadd.f32 %v113, %v114
    %v116 = vrot.slane %v115, 2
    %v117 = vadd.f32 %v115, %v116
    %v118 = vrot.slane %v117, 1
    %v119 = vadd.f32 %v117, %v118
    %v120 = vsel %vm68, %v65, 0.0
    %v121 = vadd.f32 %v61, %v120
    %v122 = vrot.slane %v121, 4
    %v123 = vadd.f32 %v121, %v122
    %v124 = vrot.slane %v123, 2
    %v125 = vadd.f32 %v123, %v124
    %v126 = vrot.slane %v125, 1
    %v127 = vadd.f32 %v125, %v126
    %v128 = vsel %vm93, %v62, 0.0
    %v129 = vsel %vm95, %v66, 0.0
    %v130 = vadd.f32 %v128, %v129
    %v131 = vrot.slane %v130, 4
    %v132 = vadd.f32 %v130, %v131
    %v133 = vrot.slane %v132, 2
    %v134 = vadd.f32 %v132, %v133
    %v135 = vrot.slane %v134, 1
    %v136 = vadd.f32 %v134, %v135
    %v137 = vlaneseq
    %v138 = vshrl.u32 %v137, 7
    %v139 = vadd.s32 %v138, 8
    %v140 = vlaneseq
    %v141 = vshrl.u32 %v140, 7
    %v142 = vsub.s32 0, %v141
    %v143 = vrot.slane %v67, %v142
    %v144 = vlaneseq
    %v145 = vshrl.u32 %v144, 7
    %v146 = vsub.s32 1, %v145
    %v147 = vrot.slane %v67, %v146
    %v148 = vlaneseq
    %v149 = vshrl.u32 %v148, 7
    %v150 = vsub.s32 2, %v149
    %v151 = vrot.slane %v67, %v150
    %v152 = vlaneseq
    %v153 = vshrl.u32 %v152, 7
    %v154 = vsub.s32 3, %v153
    %v155 = vrot.slane %v67, %v154
    %vm156 = vcmp.eq.s32.totalorder %v138, %v143
    %vm157 = vcmp.eq.s32.totalorder %v138, %v147
    %vm158 = vcmp.eq.s32.totalorder %v138, %v151
    %vm159 = vcmp.eq.s32.totalorder %v138, %v155
    %vm160 = vcmp.eq.s32.totalorder %v139, %v143
    %vm161 = vcmp.eq.s32.totalorder %v139, %v147
    %vm162 = vcmp.eq.s32.totalorder %v139, %v151
    %vm163 = vcmp.eq.s32.totalorder %v139, %v155
    %v164 = vsel %vm156, %v59, 0.0
    %v165 = vsel %vm157, %v60, 0.0
    %v166 = vsel %vm158, %v61, 0.0
    %v167 = vsel %vm159, %v62, 0.0
    %v168 = vsel %vm160, %v63, 0.0
    %v169 = vsel %vm161, %v64, 0.0
    %v170 = vsel %vm162, %v65, 0.0
    %v171 = vsel %vm163, %v66, 0.0
    %v172 = vsel %vm68, %v168, 0.0
    %v173 = vadd.f32 %v164, %v172
    %v174 = vrot.slane %v173, 4
    %v175 = vadd.f32 %v173, %v174
    %v176 = vrot.slane %v175, 2
    %v177 = vadd.f32 %v175, %v176
    %v178 = vrot.slane %v177, 1
    %v179 = vadd.f32 %v177, %v178
    %v180 = vsel %vm68, %v169, 0.0
    %v181 = vadd.f32 %v165, %v180
    %v182 = vrot.slane %v181, 4
    %v183 = vadd.f32 %v181, %v182
    %v184 = vrot.slane %v183, 2
    %v185 = vadd.f32 %v183, %v184
    %v186 = vrot.slane %v185, 1
    %v187 = vadd.f32 %v185, %v186
    %v188 = vsel %vm68, %v170, 0.0
    %v189 = vadd.f32 %v166, %v188
    %v190 = vrot.slane %v189, 4
    %v191 = vadd.f32 %v189, %v190
    %v192 = vrot.slane %v191, 2
    %v193 = vadd.f32 %v191, %v192
    %v194 = vrot.slane %v193, 1
    %v195 = vadd.f32 %v193, %v194
    %v196 = vsel %vm93, %v167, 0.0
    %v197 = vsel %vm95, %v171, 0.0
    %v198 = vadd.f32 %v196, %v197
    %v199 = vrot.slane %v198, 4
    %v200 = vadd.f32 %v198, %v199
    %v201 = vrot.slane %v200, 2
    %v202 = vadd.f32 %v200, %v201
    %v203 = vrot.slane %v202, 1
    %v204 = vadd.f32 %v202, %v203
    %v205 = vsub.f32 %v59, %v76
    %v206 = vsub.f32 %v60, %v84
    %v207 = vsub.f32 %v61, %v92
    %v208 = vsub.f32 %v62, %v103
    %v209 = vsub.f32 %v63, %v76
    %v210 = vsub.f32 %v64, %v84
    %v211 = vsub.f32 %v65, %v92
    %v212 = vsub.f32 %v66, %v103
    %v213 = vmul.f32 %v205, 1.442695
    %v214 = vpow.pop %v213
    %v215 = vmul.f32 %v206, 1.442695
    %v216 = vpow.pop %v215
    %v217 = vmul.f32 %v207, 1.442695
    %v218 = vpow.pop %v217
    %v219 = vmul.f32 %v208, 1.442695
    %v220 = vpow.pop %v219
    %v221 = vmul.f32 %v209, 1.442695
    %v222 = vpow.pop %v221
    %v223 = vmul.f32 %v210, 1.442695
    %v224 = vpow.pop %v223
    %v225 = vmul.f32 %v211, 1.442695
    %v226 = vpow.pop %v225
    %v227 = vmul.f32 %v212, 1.442695
    %v228 = vpow.pop %v227
    %v229 = vsel %vm68, %v222, 0.0
    %v230 = vadd.f32 %v214, %v229
    %v231 = vrot.slane %v230, 4
    %v232 = vadd.f32 %v230, %v231
    %v233 = vrot.slane %v232, 2
    %v234 = vadd.f32 %v232, %v233
    %v235 = vrot.slane %v234, 1
    %v236 = vadd.f32 %v234, %v235
    %v237 = vsel %vm68, %v224, 0.0
    %v238 = vadd.f32 %v216, %v237
    %v239 = vrot.slane %v238, 4
    %v240 = vadd.f32 %v238, %v239
    %v241 = vrot.slane %v240, 2
    %v242 = vadd.f32 %v240, %v241
    %v243 = vrot.slane %v242, 1
    %v244 = vadd.f32 %v242, %v243
    %v245 = vsel %vm68, %v226, 0.0
    %v246 = vadd.f32 %v218, %v245
    %v247 = vrot.slane %v246, 4
    %v248 = vadd.f32 %v246, %v247
    %v249 = vrot.slane %v248, 2
    %v250 = vadd.f32 %v248, %v249
    %v251 = vrot.slane %v250, 1
    %v252 = vadd.f32 %v250, %v251
    %v253 = vsel %vm93, %v220, 0.0
    %v254 = vsel %vm95, %v228, 0.0
    %v255 = vadd.f32 %v253, %v254
    %v256 = vrot.slane %v255, 4
    %v257 = vadd.f32 %v255, %v256
    %v258 = vrot.slane %v257, 2
    %v259 = vadd.f32 %v257, %v258
    %v260 = vrot.slane %v259, 1
    %v261 = vadd.f32 %v259, %v260
    %v262 = vlog2.pop %v236
    %v263 = vmul.f32 %v262, 0.6931472
    %v264 = vlog2.pop %v244
    %v265 = vmul.f32 %v264, 0.6931472
    %v266 = vlog2.pop %v252
    %v267 = vmul.f32 %v266, 0.6931472
    %v268 = vlog2.pop %v261
    %v269 = vmul.f32 %v268, 0.6931472
    %v270 = vsub.f32 %v179, %v76
    %v271 = vsub.f32 %v187, %v84
    %v272 = vsub.f32 %v195, %v92
    %v273 = vsub.f32 %v204, %v103
    %v274 = vsub.f32 %v270, %v263
    %v275 = vsub.f32 %v271, %v265
    %v276 = vsub.f32 %v272, %v267
    %v277 = vsub.f32 %v273, %v269
    %v278 = vadd.f32 %v76, %v263
    %v279 = vadd.f32 %v84, %v265
    %v280 = vadd.f32 %v92, %v267
    %v281 = vadd.f32 %v103, %v269
    %v282 = vmul.f32 %v278, 10.0
    %v283 = vmul.f32 %v279, 10.0
    %v284 = vmul.f32 %v280, 10.0
    %v285 = vmul.f32 %v281, 10.0
    %v286 = vsub.f32 %v111, %v282
    %v287 = vsub.f32 %v119, %v283
    %v288 = vsub.f32 %v127, %v284
    %v289 = vsub.f32 %v136, %v285
    %v290 = vrcp.pop %v286
    %v291 = vmul.f32 %v274, %v290
    %v292 = vrcp.pop %v287
    %v293 = vmul.f32 %v275, %v292
    %v294 = vrcp.pop %v288
    %v295 = vmul.f32 %v276, %v294
    %v296 = vrcp.pop %v289
    %v297 = vmul.f32 %v277, %v296
    %v298 = vmul.f32 %v274, 1.442695
    %v299 = vpow.pop %v298
    %v300 = vmul.f32 %v275, 1.442695
    %v301 = vpow.pop %v300
    %v302 = vmul.f32 %v276, 1.442695
    %v303 = vpow.pop %v302
    %v304 = vmul.f32 %v277, 1.442695
    %v305 = vpow.pop %v304
    %v306 = vsub.f32 6.0, %v299
    %v307 = vsub.f32 6.0, %v301
    %v308 = vsub.f32 6.0, %v303
    %v309 = vsub.f32 6.0, %v305
    %v310 = vrsqrt.pop %v306
    %v311 = vmul.f32 %v306, %v310
    %vm312 = vcmp.eq.f32.partialorder %v306, inf
    %v313 = vsel %vm312, %v306, %v311
    %vm314 = vcmp.eq.f32.partialorder %v306, 0.0
    %v315 = vand.u32 %v306, 2147483648
    %v316 = vsel %vm314, %v315, %v313
    %v317 = vrsqrt.pop %v307
    %v318 = vmul.f32 %v307, %v317
    %vm319 = vcmp.eq.f32.partialorder %v307, inf
    %v320 = vsel %vm319, %v307, %v318
    %vm321 = vcmp.eq.f32.partialorder %v307, 0.0
    %v322 = vand.u32 %v307, 2147483648
    %v323 = vsel %vm321, %v322, %v320
    %v324 = vrsqrt.pop %v308
    %v325 = vmul.f32 %v308, %v324
    %vm326 = vcmp.eq.f32.partialorder %v308, inf
    %v327 = vsel %vm326, %v308, %v325
    %vm328 = vcmp.eq.f32.partialorder %v308, 0.0
    %v329 = vand.u32 %v308, 2147483648
    %v330 = vsel %vm328, %v329, %v327
    %v331 = vrsqrt.pop %v309
    %v332 = vmul.f32 %v309, %v331
    %vm333 = vcmp.eq.f32.partialorder %v309, inf
    %v334 = vsel %vm333, %v309, %v332
    %vm335 = vcmp.eq.f32.partialorder %v309, 0.0
    %v336 = vand.u32 %v309, 2147483648
    %v337 = vsel %vm335, %v336, %v334
    %v338 = vmul.f32 %v306, %v316
    %v339 = vmul.f32 %v307, %v323
    %v340 = vmul.f32 %v308, %v330
    %v341 = vmul.f32 %v309, %v337
    %v342 = vsub.f32 %v338, 11.18034
    %v343 = vsub.f32 %v339, 11.18034
    %v344 = vsub.f32 %v340, 11.18034
    %v345 = vsub.f32 %v341, 11.18034
    %v346 = vmul.f32 %v342, 0.6666667
    %v347 = vmul.f32 %v343, 0.6666667
    %v348 = vmul.f32 %v344, 0.6666667
    %v349 = vmul.f32 %v345, 0.6666667
    %v350 = vadd.f32 %v291, %v346
    %v351 = vadd.f32 %v293, %v347
    %v352 = vadd.f32 %v295, %v348
    %v353 = vadd.f32 %v297, %v349
    %v354 = vld [vmem:[#allocation2] sm:$0xf]
    %v359 = vcombine.low %v350, %v351
    %v360 = vcombine.low %v352, %v353
    %v362 = vunpack.c.l.s4 1966171168
    %v363 = vunpack.c.0.s8 %v362
    %v364 = vlaneseq
    %v365 = vshrl.u32 %v364, 7
    %v366 = vsub.s32 %v363, %v365
    %v367 = vrot.slane %v359, %v366
    %v369 = vunpack.c.l.s4 1966171168
    %v370 = vunpack.c.0.s8 %v369
    %v371 = vlaneseq
    %v372 = vshrl.u32 %v371, 7
    %v373 = vsub.s32 %v370, %v372
    %v374 = vrot.slane %v360, %v373
    %v375 = vcombine.low %v367, %v374
    %v377 = vunpack.c.l.s4 1966171168
    %v378 = vunpack.c.0.s8 %v377
    %v379 = vlaneseq
    %v380 = vshrl.u32 %v379, 7
    %v381 = vsub.s32 %v378, %v380
    %v382 = vrot.slane %v375, %v381
    %v384 = vadd.f32 %v354, %v382
    %v385 = vlaneseq
    %vm386 = vcmp.ge.s32.totalorder %v385, 0
    %vm387 = vcmp.lt.s32.totalorder %v385, 500
    %vm388 = vmand %vm386, %vm387
    %389 = vst.msk [vmem:[#allocation2] sm:$0xf] %vm388, %v384
    // Predicated region
    $region22: #{tpu_custom_call.1} parent=1 // pred_check
      %p390 = pneg %p50
    $region23: #{tpu_custom_call.1} parent=1 // pred_check_branch
      %392 = sbr.rel (%p390) target = $region25
    $region24: #{tpu_custom_call.1} parent=1 // pred_region
      %v393 = vld [vmem:[#allocation2] sm:$0xf]
      %v395 = vlaneseq
      %v396 = vshrl.u32 %v395, 7
      %v397 = vsub.s32 0, %v396
      %v398 = vrot.slane %v393, %v397
      %v399 = vlaneseq
      %v400 = vshrl.u32 %v399, 7
      %v401 = vsub.s32 1, %v400
      %v402 = vrot.slane %v393, %v401
      %v403 = vlaneseq
      %v404 = vshrl.u32 %v403, 7
      %v405 = vsub.s32 2, %v404
      %v406 = vrot.slane %v393, %v405
      %v407 = vlaneseq
      %v408 = vshrl.u32 %v407, 7
      %v409 = vsub.s32 3, %v408
      %v410 = vrot.slane %v393, %v409
      %vm415 = vcmask 1040384
      %v416 = vsel %vm415, %v398, 0.0
      %v417 = vsel %vm415, %v402, 0.0
      %v418 = vadd.f32 %v416, %v417
      %v419 = vsel %vm415, %v406, 0.0
      %v420 = vadd.f32 %v418, %v419
      %vm421 = vcmask 942080
      %v422 = vsel %vm421, %v410, 0.0
      %v423 = vadd.f32 %v420, %v422
      %424 = vadd.xlane.f32.xlu0 %v423
      %v425 = vpop.xlane.xlu0 %424
      %v426 = vrot.slane %v425, 4
      %v427 = vadd.f32 %v425, %v426
      %v428 = vrot.slane %v427, 2
      %v429 = vadd.f32 %v427, %v428
      %v430 = vrot.slane %v429, 1
      %v431 = vadd.f32 %v429, %v430
      %s432 = vtos %v431
      %v433 = vlaneseq
      %v434 = vand.u32 %v433, 127
      %vm435 = vcmp.eq.s32.totalorder %v138, 0
      %vm436 = vcmp.eq.s32.totalorder %v434, 0
      %vm437 = vmand %vm435, %vm436
      %v438 = vstv %s432
      %v439 = vsel %vm437, %v438, 0.0
      %440 = vst [vmem:[#allocation8] sm:$0xff] %v439
    $region25: #{tpu_custom_call.1} parent=1 // pred_fallthru
      _
    // Predicated region
    $region26: #{tpu_custom_call.1} parent=1 // pred_check
      _
    $region27: #{tpu_custom_call.1} parent=1 // pred_check_branch
      %442 = sbr.rel (0) target = $region29
    $region28: #{tpu_custom_call.1} parent=1 // pred_region
      %s444 = ssub.s32 128, 128
      %445 = vsyncadd [#allocation5], %s444
      %s447 = sshll.u32 [#allocation8], 4
      %s448 = int_to_ptr.vmem [resolvable:$true] %s447
      %450 = dma.vmem_to_hbm [thread:$0]  %s448, 128, %s2, [#allocation5]
    $region29: #{tpu_custom_call.1} parent=1 // pred_fallthru
      _
    // Predicated region
    $region30: #{tpu_custom_call.1} parent=1 // pred_check
      _
    $region31: #{tpu_custom_call.1} parent=1 // pred_check_branch
      %452 = sbr.rel (0) target = $region33
    $region32: #{tpu_custom_call.1} parent=1 // pred_region
      %453 = dma.done [#allocation5], 128
    $region33: #{tpu_custom_call.1} parent=1 // pred_fallthru
      _
    %454 = vsyncpa [#allocation4], 1
    %455 = vsyncpa [#allocation7], 1
    %456 = vsyncpa [#allocation5], 1

</llo_original>
